<compile_context>
chip_gen: v7x
topology: tpu7x:2x2x1
jax: 0.10.0
libtpu: 0.0.40
codegen_flags: <defaults>
</compile_context>

<pallas_src>
import functools

import jax
import jax.numpy as jnp
from jax.experimental import pallas as pl
from jax.experimental.pallas import tpu as pltpu

LANE = 128  # TPU vreg lane width


def client_kernel(n_ref, x_ref, y_ref, w1t_ref, b1_ref, w2_ref, b2_ref,
                  pred_ref, met_ref, acc_ref, *, seq_len, block_lanes):
    i = pl.program_id(0)
    last = pl.num_programs(0) - 1

    @pl.when(i == 0)
    def _():
        acc_ref[0] = jnp.float32(0.0)   # sum d^2
        acc_ref[1] = jnp.float32(0.0)   # sum |d|
        acc_ref[2] = jnp.float32(0.0)   # sum pred

    # ---- net forward, batch on lanes (pure VPU/XLU/EUP, no MXU) ----
    x = x_ref[...]            # (S, BLK)
    w1t = w1t_ref[...]        # (H, S)
    b1 = b1_ref[...]          # (H, 1)

    # h_pre[h, b] = sum_s w1[s, h] * x[s, b] + b1[h]   -- unrolled over S=6
    pre = w1t[:, 0:1] * x[0:1, :] + b1                 # (H, BLK)
    for s in range(1, seq_len):
        pre = pre + w1t[:, s:s + 1] * x[s:s + 1, :]
    # TODO(synk): on v6e/v7x a bf16 hidden path (~2x EUP throughput on the
    # binding tanh slot) is possible but exceeds the 1e-4 check; keep f32.
    h = jnp.tanh(pre)                                  # EUP, (H, BLK)

    # p[b] = sum_h w2[h] * h[h, b] + b2   (sublane reduce, XLU)
    p = jnp.sum(w2_ref[...] * h, axis=0, keepdims=True) + b2_ref[...]  # (1, BLK)
    pred_ref[...] = p                                  # lane-dense store

    # ---- per-block metric partial sums (exactly Client.test() math) ----
    n_valid = n_ref[0]
    start = pl.multiple_of(i * block_lanes, LANE)
    y = y_ref[:, pl.ds(start, block_lanes)]            # slice of resident y
    lane = jax.lax.broadcasted_iota(jnp.int32, p.shape, 1) + i * block_lanes
    mask = lane < n_valid                              # only the tail block masks anything

    d = jnp.where(mask, p - y, 0.0)
    acc_ref[0] = acc_ref[0] + jnp.sum(d * d)
    acc_ref[1] = acc_ref[1] + jnp.sum(jnp.abs(d))
    acc_ref[2] = acc_ref[2] + jnp.sum(jnp.where(mask, p, 0.0))

    @pl.when(i == last)
    def _():
        n = n_valid.astype(jnp.float32)
        sumsq = acc_ref[0]
        sumabs = acc_ref[1]
        sump = acc_ref[2]
        loss = sumsq / n                               # MSELoss
        mae = sumabs / n
        rmse = jnp.sqrt(loss)

        # NOTE: as in the torch code, the "mean" used by RAE / R^2 is the
        # mean of the PREDICTIONS (output.mean()), not of the targets, and
        # no epsilon is added -- matching the reference semantics exactly.
        pmean = sump / n
        yfull = y_ref[...]                             # (1, Bp), VMEM-resident
        lane_f = jax.lax.broadcasted_iota(jnp.int32, yfull.shape, 1)
        ydev = jnp.where(lane_f < n_valid, yfull - pmean, 0.0)
        rae = sumabs / jnp.sum(jnp.abs(ydev))
        r2 = 1.0 - sumsq / jnp.sum(ydev * ydev)

        # Pack all five scalars into one lane-dense (1, 128) slab.
        lane128 = jax.lax.broadcasted_iota(jnp.int32, (1, LANE), 1)
        m = jnp.where(lane128 == 0, loss, jnp.float32(0.0))
        m = jnp.where(lane128 == 1, mae, m)
        m = jnp.where(lane128 == 2, rmse, m)
        m = jnp.where(lane128 == 3, rae, m)
        m = jnp.where(lane128 == 4, r2, m)
        met_ref[...] = m


def _round_up(x, m):
    return ((x + m - 1) // m) * m


def client_forward(x_sb, y_1b, n_valid, w1, b1, w2, b2, *, block_lanes=8192):
    """x_sb: (S, Bp) windows already laid out batch-on-lanes (Bp a multiple of
    block_lanes); y_1b: (1, Bp) targets; n_valid: number of valid windows
    (dynamic -- passed through SMEM, so different batch sizes with the same
    padded shape do NOT recompile).
    Returns (pred (n_valid,), loss, mae, rmse, rae, r2) matching Client.test()."""
    S, Bp = x_sb.shape
    H = w1.shape[1]
    block_lanes = min(block_lanes, Bp)
    assert block_lanes % LANE == 0 and Bp % block_lanes == 0
    num_blocks = Bp // block_lanes

    def f32(a):
        return a if a.dtype == jnp.float32 else a.astype(jnp.float32)

    # Only the tiny weights get relaid out here (negligible bytes).
    w1t = f32(w1).T                                    # (H, S)
    b1c = f32(b1).reshape(H, 1)                        # (H, 1)
    w2c = f32(w2).reshape(H, 1)                        # (H, 1)
    b2c = f32(b2).reshape(1, 1)                        # (1, 1)
    n_arr = jnp.asarray([n_valid], dtype=jnp.int32)    # SMEM scalar prefetch

    kernel = functools.partial(client_kernel, seq_len=S, block_lanes=block_lanes)

    pred, met = pl.pallas_call(
        kernel,
        out_shape=(
            jax.ShapeDtypeStruct((1, Bp), jnp.float32),    # predictions (lane-dense)
            jax.ShapeDtypeStruct((1, LANE), jnp.float32),  # packed metrics
        ),
        grid_spec=pltpu.PrefetchScalarGridSpec(
            num_scalar_prefetch=1,
            grid=(num_blocks,),
            in_specs=[
                pl.BlockSpec((S, block_lanes), lambda i, n: (0, i)),  # x tile (pipelined)
                pl.BlockSpec((1, Bp), lambda i, n: (0, 0)),           # y fully resident
                pl.BlockSpec((H, S), lambda i, n: (0, 0)),            # weights resident
                pl.BlockSpec((H, 1), lambda i, n: (0, 0)),
                pl.BlockSpec((H, 1), lambda i, n: (0, 0)),
                pl.BlockSpec((1, 1), lambda i, n: (0, 0)),
            ],
            out_specs=(
                pl.BlockSpec((1, block_lanes), lambda i, n: (0, i)),  # pred tile
                pl.BlockSpec((1, LANE), lambda i, n: (0, 0)),         # metrics (finalize)
            ),
            scratch_shapes=[pltpu.SMEM((4,), jnp.float32)],           # metric accumulators
        ),
        compiler_params=pltpu.CompilerParams(
            dimension_semantics=("arbitrary",),        # metric accumulation axis
            vmem_limit_bytes=32 * 1024 * 1024),
    )(n_arr, f32(x_sb), f32(y_1b), w1t, b1c, w2c, b2c)

    return (pred[0, :n_valid], met[0, 0], met[0, 1], met[0, 2], met[0, 3], met[0, 4])


def _reference(x, y, w1, b1, w2, b2):
    hi = jax.lax.Precision.HIGHEST
    h = jnp.tanh(jnp.einsum('bs,sh->bh', x, w1, precision=hi) + b1)
    p = (jnp.einsum('bh,ho->bo', h, w2, precision=hi) + b2).reshape(-1)
    d = p - y
    loss = jnp.mean(d * d)
    mae = jnp.mean(jnp.abs(d))
    rmse = jnp.sqrt(jnp.mean(d * d))
    pmean = jnp.mean(p)
    rae = jnp.sum(jnp.abs(d)) / jnp.sum(jnp.abs(y - pmean))
    r2 = 1.0 - jnp.sum(d * d) / jnp.sum((y - pmean) ** 2)
    return p, loss, mae, rmse, rae, r2


if __name__ == "__main__":
    key = jax.random.PRNGKey(0)
    k_series, k_w1, k_b1, k_w2, k_b2 = jax.random.split(key, 5)

    # Mirrors MyData(seq_length=6): synthesize the "percent" series and build
    # sliding windows, DIRECTLY in (S, Bp) batch-on-lanes layout (no transpose
    # / pad pass).  B is not a multiple of 128 and BLK < Bp so the grid,
    # accumulate/finalize, and tail-mask paths all get exercised.
    SEQ_LEN = 6
    B = 300
    H = 32
    BLK = 128
    Bp = _round_up(B, BLK)

    series = jax.random.uniform(k_series, (B + SEQ_LEN,), jnp.float32)  # busy/total in [0,1)
    col = jnp.minimum(jnp.arange(Bp), B - 1)           # padded cols repeat the last window
    idx_sb = jnp.arange(SEQ_LEN)[:, None] + col[None, :]                # (S, Bp)
    x_sb = series[idx_sb]                                               # (S, Bp)
    y_1b = series[SEQ_LEN + col].reshape(1, Bp)                         # (1, Bp)

    # Deterministic "net" parameters (Client.net comes from outside client.py).
    w1 = 0.3 * jax.random.normal(k_w1, (SEQ_LEN, H), jnp.float32)
    b1 = 0.05 * jax.random.normal(k_b1, (1, H), jnp.float32)
    w2 = 0.3 * jax.random.normal(k_w2, (H, 1), jnp.float32)
    b2 = 0.05 * jax.random.normal(k_b2, (1, 1), jnp.float32)

    outs = client_forward(x_sb, y_1b, B, w1, b1, w2, b2, block_lanes=BLK)
    outs = jax.block_until_ready(outs)

    refs = _reference(x_sb[:, :B].T, y_1b[0, :B], w1, b1, w2, b2)
    for got, exp in zip(outs, refs):
        assert jnp.allclose(got, exp, atol=1e-4, rtol=1e-4), (got, exp)

    print("KERNEL_OK")
</pallas_src>

<mosaic_0001>
module attributes {stable_mosaic.version = 11 : i64} {
  func.func @client_kernel(%arg0: i32, %arg1: memref<1xi32, #tpu.memory_space<smem>>, %arg2: memref<6x128xf32, #tpu.memory_space<vmem>>, %arg3: memref<1x384xf32, #tpu.memory_space<vmem>>, %arg4: memref<32x6xf32, #tpu.memory_space<vmem>>, %arg5: memref<32x1xf32, #tpu.memory_space<vmem>>, %arg6: memref<32x1xf32, #tpu.memory_space<vmem>>, %arg7: memref<1x1xf32, #tpu.memory_space<vmem>>, %arg8: memref<1x128xf32, #tpu.memory_space<vmem>>, %arg9: memref<1x128xf32, #tpu.memory_space<vmem>>, %arg10: memref<4xf32, #tpu.memory_space<smem>>) attributes {dimension_semantics = [#tpu.dimension_semantics<arbitrary>], iteration_bounds = array<i64: 3>, scalar_prefetch = 1 : i64, scratch_operands = 1 : i64, tpu.core_type = #tpu.core_type<tc>, window_params = [{transform_indices = @transform_0, window_bounds = array<i64: 6, 128>}, {pipeline_mode = #tpu.pipeline_mode<synchronous>, transform_indices = @transform_1, window_bounds = array<i64: 1, 384>}, {pipeline_mode = #tpu.pipeline_mode<synchronous>, transform_indices = @transform_2, window_bounds = array<i64: 32, 6>}, {pipeline_mode = #tpu.pipeline_mode<synchronous>, transform_indices = @transform_3, window_bounds = array<i64: 32, 1>}, {pipeline_mode = #tpu.pipeline_mode<synchronous>, transform_indices = @transform_4, window_bounds = array<i64: 32, 1>}, {pipeline_mode = #tpu.pipeline_mode<synchronous>, transform_indices = @transform_5, window_bounds = array<i64: 1, 1>}, {transform_indices = @transform_6, window_bounds = array<i64: 1, 128>}, {pipeline_mode = #tpu.pipeline_mode<synchronous>, transform_indices = @transform_7, window_bounds = array<i64: 1, 128>}]} {
    %c0_i32 = arith.constant 0 : i32
    %0 = arith.cmpi eq, %arg0, %c0_i32 : i32
    %1 = arith.extui %0 : i1 to i32
    %c0_i32_0 = arith.constant 0 : i32
    %2 = arith.cmpi ne, %1, %c0_i32_0 : i32
    scf.if %2 {
      %cst_25 = arith.constant 0.000000e+00 : f32
      %c0_26 = arith.constant 0 : index
      %95 = memref.load %arg10[%c0_26] : memref<4xf32, #tpu.memory_space<smem>>
      memref.store %cst_25, %arg10[%c0_26] : memref<4xf32, #tpu.memory_space<smem>>
      %cst_27 = arith.constant 0.000000e+00 : f32
      %c1_28 = arith.constant 1 : index
      %96 = memref.load %arg10[%c1_28] : memref<4xf32, #tpu.memory_space<smem>>
      memref.store %cst_27, %arg10[%c1_28] : memref<4xf32, #tpu.memory_space<smem>>
      %cst_29 = arith.constant 0.000000e+00 : f32
      %c2_30 = arith.constant 2 : index
      %97 = memref.load %arg10[%c2_30] : memref<4xf32, #tpu.memory_space<smem>>
      memref.store %cst_29, %arg10[%c2_30] : memref<4xf32, #tpu.memory_space<smem>>
    } else {
    }
    %c0 = arith.constant 0 : index
    %c0_1 = arith.constant 0 : index
    %3 = vector.load %arg2[%c0, %c0_1] : memref<6x128xf32, #tpu.memory_space<vmem>>, vector<6x128xf32>
    %c0_2 = arith.constant 0 : index
    %c0_3 = arith.constant 0 : index
    %4 = vector.load %arg4[%c0_2, %c0_3] : memref<32x6xf32, #tpu.memory_space<vmem>>, vector<32x6xf32>
    %c0_4 = arith.constant 0 : index
    %c0_5 = arith.constant 0 : index
    %5 = vector.load %arg5[%c0_4, %c0_5] : memref<32x1xf32, #tpu.memory_space<vmem>>, vector<32x1xf32>
    %6 = vector.extract_strided_slice %4 {offsets = [0, 0], sizes = [32, 1], strides = [1, 1]} : vector<32x6xf32> to vector<32x1xf32>
    %7 = vector.extract_strided_slice %3 {offsets = [0, 0], sizes = [1, 128], strides = [1, 1]} : vector<6x128xf32> to vector<1x128xf32>
    %8 = vector.broadcast %6 : vector<32x1xf32> to vector<32x128xf32>
    %9 = vector.broadcast %7 : vector<1x128xf32> to vector<32x128xf32>
    %10 = arith.mulf %8, %9 : vector<32x128xf32>
    %11 = vector.broadcast %5 : vector<32x1xf32> to vector<32x128xf32>
    %12 = arith.addf %10, %11 : vector<32x128xf32>
    %13 = vector.extract_strided_slice %4 {offsets = [0, 1], sizes = [32, 1], strides = [1, 1]} : vector<32x6xf32> to vector<32x1xf32>
    %14 = vector.extract_strided_slice %3 {offsets = [1, 0], sizes = [1, 128], strides = [1, 1]} : vector<6x128xf32> to vector<1x128xf32>
    %15 = vector.broadcast %13 : vector<32x1xf32> to vector<32x128xf32>
    %16 = vector.broadcast %14 : vector<1x128xf32> to vector<32x128xf32>
    %17 = arith.mulf %15, %16 : vector<32x128xf32>
    %18 = arith.addf %12, %17 : vector<32x128xf32>
    %19 = vector.extract_strided_slice %4 {offsets = [0, 2], sizes = [32, 1], strides = [1, 1]} : vector<32x6xf32> to vector<32x1xf32>
    %20 = vector.extract_strided_slice %3 {offsets = [2, 0], sizes = [1, 128], strides = [1, 1]} : vector<6x128xf32> to vector<1x128xf32>
    %21 = vector.broadcast %19 : vector<32x1xf32> to vector<32x128xf32>
    %22 = vector.broadcast %20 : vector<1x128xf32> to vector<32x128xf32>
    %23 = arith.mulf %21, %22 : vector<32x128xf32>
    %24 = arith.addf %18, %23 : vector<32x128xf32>
    %25 = vector.extract_strided_slice %4 {offsets = [0, 3], sizes = [32, 1], strides = [1, 1]} : vector<32x6xf32> to vector<32x1xf32>
    %26 = vector.extract_strided_slice %3 {offsets = [3, 0], sizes = [1, 128], strides = [1, 1]} : vector<6x128xf32> to vector<1x128xf32>
    %27 = vector.broadcast %25 : vector<32x1xf32> to vector<32x128xf32>
    %28 = vector.broadcast %26 : vector<1x128xf32> to vector<32x128xf32>
    %29 = arith.mulf %27, %28 : vector<32x128xf32>
    %30 = arith.addf %24, %29 : vector<32x128xf32>
    %31 = vector.extract_strided_slice %4 {offsets = [0, 4], sizes = [32, 1], strides = [1, 1]} : vector<32x6xf32> to vector<32x1xf32>
    %32 = vector.extract_strided_slice %3 {offsets = [4, 0], sizes = [1, 128], strides = [1, 1]} : vector<6x128xf32> to vector<1x128xf32>
    %33 = vector.broadcast %31 : vector<32x1xf32> to vector<32x128xf32>
    %34 = vector.broadcast %32 : vector<1x128xf32> to vector<32x128xf32>
    %35 = arith.mulf %33, %34 : vector<32x128xf32>
    %36 = arith.addf %30, %35 : vector<32x128xf32>
    %37 = vector.extract_strided_slice %4 {offsets = [0, 5], sizes = [32, 1], strides = [1, 1]} : vector<32x6xf32> to vector<32x1xf32>
    %38 = vector.extract_strided_slice %3 {offsets = [5, 0], sizes = [1, 128], strides = [1, 1]} : vector<6x128xf32> to vector<1x128xf32>
    %39 = vector.broadcast %37 : vector<32x1xf32> to vector<32x128xf32>
    %40 = vector.broadcast %38 : vector<1x128xf32> to vector<32x128xf32>
    %41 = arith.mulf %39, %40 : vector<32x128xf32>
    %42 = arith.addf %36, %41 : vector<32x128xf32>
    %43 = math.tanh %42 : vector<32x128xf32>
    %c0_6 = arith.constant 0 : index
    %c0_7 = arith.constant 0 : index
    %44 = vector.load %arg6[%c0_6, %c0_7] : memref<32x1xf32, #tpu.memory_space<vmem>>, vector<32x1xf32>
    %45 = vector.broadcast %44 : vector<32x1xf32> to vector<32x128xf32>
    %46 = arith.mulf %45, %43 : vector<32x128xf32>
    %cst = arith.constant dense<0.000000e+00> : vector<128xf32>
    %47 = vector.multi_reduction <add>, %46, %cst [0] : vector<32x128xf32> to vector<128xf32>
    %48 = vector.shape_cast %47 : vector<128xf32> to vector<1x128xf32>
    %c0_8 = arith.constant 0 : index
    %c0_9 = arith.constant 0 : index
    %49 = vector.load %arg7[%c0_8, %c0_9] : memref<1x1xf32, #tpu.memory_space<vmem>>, vector<1x1xf32>
    %50 = vector.broadcast %49 : vector<1x1xf32> to vector<1x128xf32>
    %51 = arith.addf %48, %50 : vector<1x128xf32>
    %c0_10 = arith.constant 0 : index
    %c0_11 = arith.constant 0 : index
    %52 = vector.load %arg8[%c0_10, %c0_11] : memref<1x128xf32, #tpu.memory_space<vmem>>, vector<1x128xf32>
    tpu.vector_store %arg8[%c0_10, %c0_11], %51 {strides = array<i32>} : memref<1x128xf32, #tpu.memory_space<vmem>>, vector<1x128xf32>,
    %c0_12 = arith.constant 0 : index
    %53 = memref.load %arg1[%c0_12] : memref<1xi32, #tpu.memory_space<smem>>
    %c128_i32 = arith.constant 128 : i32
    %54 = arith.muli %arg0, %c128_i32 : i32
    %55 = tpu.assume_multiple %54, 128 : i32
    %c0_13 = arith.constant 0 : index
    %56 = arith.index_cast %55 : i32 to index
    %57 = vector.load %arg3[%c0_13, %56] : memref<1x384xf32, #tpu.memory_space<vmem>>, vector<1x128xf32>
    %58 = tpu.iota {dimensions = array<i32: 1>} : vector<1x128xi32>
    %c128_i32_14 = arith.constant 128 : i32
    %59 = arith.muli %arg0, %c128_i32_14 : i32
    %60 = vector.broadcast %59 : i32 to vector<1x128xi32>
    %61 = arith.addi %58, %60 : vector<1x128xi32>
    %62 = vector.broadcast %53 : i32 to vector<1x128xi32>
    %63 = arith.cmpi slt, %61, %62 : vector<1x128xi32>
    %64 = arith.subf %51, %57 : vector<1x128xf32>
    %cst_15 = arith.constant 0.000000e+00 : f32
    %65 = vector.broadcast %cst_15 : f32 to vector<1x128xf32>
    %66 = arith.select %63, %64, %65 : vector<1x128xi1>, vector<1x128xf32>
    %c0_16 = arith.constant 0 : index
    %67 = memref.load %arg10[%c0_16] : memref<4xf32, #tpu.memory_space<smem>>
    %68 = arith.mulf %66, %66 : vector<1x128xf32>
    %69 = vector.shape_cast %68 : vector<1x128xf32> to vector<1x1x128xf32>
    %cst_17 = arith.constant dense<0.000000e+00> : vector<1xf32>
    %70 = vector.multi_reduction <add>, %69, %cst_17 [1, 2] : vector<1x1x128xf32> to vector<1xf32>
    %71 = vector.shape_cast %70 : vector<1xf32> to vector<1x1x1xf32>
    %72 = vector.extract %71[0, 0, 0] : f32 from vector<1x1x1xf32>
    %73 = arith.addf %67, %72 : f32
    %c0_18 = arith.constant 0 : index
    %74 = memref.load %arg10[%c0_18] : memref<4xf32, #tpu.memory_space<smem>>
    memref.store %73, %arg10[%c0_18] : memref<4xf32, #tpu.memory_space<smem>>
    %c1 = arith.constant 1 : index
    %75 = memref.load %arg10[%c1] : memref<4xf32, #tpu.memory_space<smem>>
    %76 = math.absf %66 : vector<1x128xf32>
    %77 = vector.shape_cast %76 : vector<1x128xf32> to vector<1x1x128xf32>
    %cst_19 = arith.constant dense<0.000000e+00> : vector<1xf32>
    %78 = vector.multi_reduction <add>, %77, %cst_19 [1, 2] : vector<1x1x128xf32> to vector<1xf32>
    %79 = vector.shape_cast %78 : vector<1xf32> to vector<1x1x1xf32>
    %80 = vector.extract %79[0, 0, 0] : f32 from vector<1x1x1xf32>
    %81 = arith.addf %75, %80 : f32
    %c1_20 = arith.constant 1 : index
    %82 = memref.load %arg10[%c1_20] : memref<4xf32, #tpu.memory_space<smem>>
    memref.store %81, %arg10[%c1_20] : memref<4xf32, #tpu.memory_space<smem>>
    %c2 = arith.constant 2 : index
    %83 = memref.load %arg10[%c2] : memref<4xf32, #tpu.memory_space<smem>>
    %cst_21 = arith.constant 0.000000e+00 : f32
    %84 = vector.broadcast %cst_21 : f32 to vector<1x128xf32>
    %85 = arith.select %63, %51, %84 : vector<1x128xi1>, vector<1x128xf32>
    %86 = vector.shape_cast %85 : vector<1x128xf32> to vector<1x1x128xf32>
    %cst_22 = arith.constant dense<0.000000e+00> : vector<1xf32>
    %87 = vector.multi_reduction <add>, %86, %cst_22 [1, 2] : vector<1x1x128xf32> to vector<1xf32>
    %88 = vector.shape_cast %87 : vector<1xf32> to vector<1x1x1xf32>
    %89 = vector.extract %88[0, 0, 0] : f32 from vector<1x1x1xf32>
    %90 = arith.addf %83, %89 : f32
    %c2_23 = arith.constant 2 : index
    %91 = memref.load %arg10[%c2_23] : memref<4xf32, #tpu.memory_space<smem>>
    memref.store %90, %arg10[%c2_23] : memref<4xf32, #tpu.memory_space<smem>>
    %c2_i32 = arith.constant 2 : i32
    %92 = arith.cmpi eq, %arg0, %c2_i32 : i32
    %93 = arith.extui %92 : i1 to i32
    %c0_i32_24 = arith.constant 0 : i32
    %94 = arith.cmpi ne, %93, %c0_i32_24 : i32
    scf.if %94 {
      %95 = arith.sitofp %53 : i32 to f32
      %c0_25 = arith.constant 0 : index
      %96 = memref.load %arg10[%c0_25] : memref<4xf32, #tpu.memory_space<smem>>
      %c1_26 = arith.constant 1 : index
      %97 = memref.load %arg10[%c1_26] : memref<4xf32, #tpu.memory_space<smem>>
      %c2_27 = arith.constant 2 : index
      %98 = memref.load %arg10[%c2_27] : memref<4xf32, #tpu.memory_space<smem>>
      %99 = arith.divf %96, %95 : f32
      %100 = arith.divf %97, %95 : f32
      %101 = math.sqrt %99 : f32
      %102 = arith.divf %98, %95 : f32
      %c0_28 = arith.constant 0 : index
      %c0_29 = arith.constant 0 : index
      %103 = vector.load %arg3[%c0_28, %c0_29] : memref<1x384xf32, #tpu.memory_space<vmem>>, vector<1x384xf32>
      %104 = tpu.iota {dimensions = array<i32: 1>} : vector<1x384xi32>
      %105 = vector.broadcast %53 : i32 to vector<1x384xi32>
      %106 = arith.cmpi slt, %104, %105 : vector<1x384xi32>
      %107 = vector.broadcast %102 : f32 to vector<1x384xf32>
      %108 = arith.subf %103, %107 : vector<1x384xf32>
      %cst_30 = arith.constant 0.000000e+00 : f32
      %109 = vector.broadcast %cst_30 : f32 to vector<1x384xf32>
      %110 = arith.select %106, %108, %109 : vector<1x384xi1>, vector<1x384xf32>
      %111 = math.absf %110 : vector<1x384xf32>
      %112 = vector.shape_cast %111 : vector<1x384xf32> to vector<1x1x384xf32>
      %cst_31 = arith.constant dense<0.000000e+00> : vector<1xf32>
      %113 = vector.multi_reduction <add>, %112, %cst_31 [1, 2] : vector<1x1x384xf32> to vector<1xf32>
      %114 = vector.shape_cast %113 : vector<1xf32> to vector<1x1x1xf32>
      %115 = vector.extract %114[0, 0, 0] : f32 from vector<1x1x1xf32>
      %116 = arith.divf %97, %115 : f32
      %117 = arith.mulf %110, %110 : vector<1x384xf32>
      %118 = vector.shape_cast %117 : vector<1x384xf32> to vector<1x1x384xf32>
      %cst_32 = arith.constant dense<0.000000e+00> : vector<1xf32>
      %119 = vector.multi_reduction <add>, %118, %cst_32 [1, 2] : vector<1x1x384xf32> to vector<1xf32>
      %120 = vector.shape_cast %119 : vector<1xf32> to vector<1x1x1xf32>
      %121 = vector.extract %120[0, 0, 0] : f32 from vector<1x1x1xf32>
      %122 = arith.divf %96, %121 : f32
      %cst_33 = arith.constant 1.000000e+00 : f32
      %123 = arith.subf %cst_33, %122 : f32
      %124 = tpu.iota {dimensions = array<i32: 1>} : vector<1x128xi32>
      %c0_i32_34 = arith.constant 0 : i32
      %125 = vector.broadcast %c0_i32_34 : i32 to vector<1x128xi32>
      %126 = arith.cmpi eq, %124, %125 : vector<1x128xi32>
      %cst_35 = arith.constant 0.000000e+00 : f32
      %127 = vector.broadcast %99 : f32 to vector<1x128xf32>
      %128 = vector.broadcast %cst_35 : f32 to vector<1x128xf32>
      %129 = arith.select %126, %127, %128 : vector<1x128xi1>, vector<1x128xf32>
      %c1_i32 = arith.constant 1 : i32
      %130 = vector.broadcast %c1_i32 : i32 to vector<1x128xi32>
      %131 = arith.cmpi eq, %124, %130 : vector<1x128xi32>
      %132 = vector.broadcast %100 : f32 to vector<1x128xf32>
      %133 = arith.select %131, %132, %129 : vector<1x128xi1>, vector<1x128xf32>
      %c2_i32_36 = arith.constant 2 : i32
      %134 = vector.broadcast %c2_i32_36 : i32 to vector<1x128xi32>
      %135 = arith.cmpi eq, %124, %134 : vector<1x128xi32>
      %136 = vector.broadcast %101 : f32 to vector<1x128xf32>
      %137 = arith.select %135, %136, %133 : vector<1x128xi1>, vector<1x128xf32>
      %c3_i32 = arith.constant 3 : i32
      %138 = vector.broadcast %c3_i32 : i32 to vector<1x128xi32>
      %139 = arith.cmpi eq, %124, %138 : vector<1x128xi32>
      %140 = vector.broadcast %116 : f32 to vector<1x128xf32>
      %141 = arith.select %139, %140, %137 : vector<1x128xi1>, vector<1x128xf32>
      %c4_i32 = arith.constant 4 : i32
      %142 = vector.broadcast %c4_i32 : i32 to vector<1x128xi32>
      %143 = arith.cmpi eq, %124, %142 : vector<1x128xi32>
      %144 = vector.broadcast %123 : f32 to vector<1x128xf32>
      %145 = arith.select %143, %144, %141 : vector<1x128xi1>, vector<1x128xf32>
      %c0_37 = arith.constant 0 : index
      %c0_38 = arith.constant 0 : index
      %146 = vector.load %arg9[%c0_37, %c0_38] : memref<1x128xf32, #tpu.memory_space<vmem>>, vector<1x128xf32>
      tpu.vector_store %arg9[%c0_37, %c0_38], %145 {strides = array<i32>} : memref<1x128xf32, #tpu.memory_space<vmem>>, vector<1x128xf32>,
    } else {
    }
    return
  }
  func.func @transform_0(%arg0: i32, %arg1: memref<1xi32, #tpu.memory_space<smem>>) -> (i32, i32) {
    %c0_i32 = arith.constant 0 : i32
    %c0_i32_0 = arith.constant 0 : i32
    return %c0_i32, %arg0 : i32, i32
  }
  func.func @transform_1(%arg0: i32, %arg1: memref<1xi32, #tpu.memory_space<smem>>) -> (i32, i32) {
    %c0_i32 = arith.constant 0 : i32
    %c0_i32_0 = arith.constant 0 : i32
    %c0_i32_1 = arith.constant 0 : i32
    return %c0_i32, %c0_i32_0 : i32, i32
  }
  func.func @transform_2(%arg0: i32, %arg1: memref<1xi32, #tpu.memory_space<smem>>) -> (i32, i32) {
    %c0_i32 = arith.constant 0 : i32
    %c0_i32_0 = arith.constant 0 : i32
    %c0_i32_1 = arith.constant 0 : i32
    return %c0_i32, %c0_i32_0 : i32, i32
  }
  func.func @transform_3(%arg0: i32, %arg1: memref<1xi32, #tpu.memory_space<smem>>) -> (i32, i32) {
    %c0_i32 = arith.constant 0 : i32
    %c0_i32_0 = arith.constant 0 : i32
    %c0_i32_1 = arith.constant 0 : i32
    return %c0_i32, %c0_i32_0 : i32, i32
  }
  func.func @transform_4(%arg0: i32, %arg1: memref<1xi32, #tpu.memory_space<smem>>) -> (i32, i32) {
    %c0_i32 = arith.constant 0 : i32
    %c0_i32_0 = arith.constant 0 : i32
    %c0_i32_1 = arith.constant 0 : i32
    return %c0_i32, %c0_i32_0 : i32, i32
  }
  func.func @transform_5(%arg0: i32, %arg1: memref<1xi32, #tpu.memory_space<smem>>) -> (i32, i32) {
    %c0_i32 = arith.constant 0 : i32
    %c0_i32_0 = arith.constant 0 : i32
    %c0_i32_1 = arith.constant 0 : i32
    return %c0_i32, %c0_i32_0 : i32, i32
  }
  func.func @transform_6(%arg0: i32, %arg1: memref<1xi32, #tpu.memory_space<smem>>) -> (i32, i32) {
    %c0_i32 = arith.constant 0 : i32
    %c0_i32_0 = arith.constant 0 : i32
    return %c0_i32, %arg0 : i32, i32
  }
  func.func @transform_7(%arg0: i32, %arg1: memref<1xi32, #tpu.memory_space<smem>>) -> (i32, i32) {
    %c0_i32 = arith.constant 0 : i32
    %c0_i32_0 = arith.constant 0 : i32
    %c0_i32_1 = arith.constant 0 : i32
    return %c0_i32, %c0_i32_0 : i32, i32
  }
}

</mosaic_0001>

<llo_original>
// kernel: tpu_custom_call.1
$region0: #{tpu_custom_call.1}
  #allocation0 [shape = 'u32[]', space=smem, size = 0x4, offset = 0x4, fixed_abs, tag = 'smem constant byte address 0x4 - core index']
  #allocation1 [shape = 'u32[144,128]{1,0:T(1,128)}', space=vmem, size = 0x12000, scoped, tag = 'internal scratch']
  #allocation2 [shape = 'f32[4]{0:T(128)}', space=smem, size = 0x200, scoped, tag = 'scratch operand']
  #allocation3 [shape = 's32[1]{0}', space=sflag, size = 0x4, scoped, tag = 'scoped memory for tpu_custom_call.1']
  #allocation4 [shape = 's32[1]{0:T(128)S(6)}', space=smem, size = 0x200, scoped, tag = 'prefetched SMEM operand 0']
  #allocation5 [shape = 'f32[1,1]{1,0:T(1,128)S(1)}', space=vmem, size = 0x200, scoped, tag = 'scoped memory for tpu_custom_call.1']
  %s0 = inlined_call_operand.<no memory space> [shape: s32[1], index: 0, kind: input, shape index: {}]
  %s1 = inlined_call_operand.vmem [shape: f32[6,384], index: 1, kind: input, shape index: {}]
  %s2 = inlined_call_operand.vmem [shape: f32[1,384], index: 2, kind: input, shape index: {}]
  %s3 = inlined_call_operand.vmem [shape: f32[32,6], index: 3, kind: input, shape index: {}]
  %s4 = inlined_call_operand.vmem [shape: f32[32,1], index: 4, kind: input, shape index: {}]
  %s5 = inlined_call_operand.vmem [shape: f32[32,1], index: 5, kind: input, shape index: {}]
  %s6 = inlined_call_operand.<no memory space> [shape: f32[1,1], index: 6, kind: input, shape index: {}]
  %s7 = inlined_call_operand.hbm [shape: f32[1,384], index: 7, kind: output, shape index: {0}]
  %s8 = inlined_call_operand.hbm [shape: f32[1,128], index: 8, kind: output, shape index: {1}]
  %9 = xla_tuple %s7, %s8
  %s10 = sld [smem:[#allocation0]]
  $region73: #{tpu_custom_call.1} parent=0
    _
  %s12 = ssub.s32 1, %s10
  %s13 = scalar_select 0, %s12, %s10
  %14 = sst [smem:[#allocation4]] %s0
  %v15 = vstv %s6
  %16 = vst [vmem:[#allocation5] sm:$0x1] %v15
  $region1: #{tpu_custom_call.1} parent=0
    #allocation6 [shape = 'u8[1024]{0}', space=vmem, size = 0x400, scoped, tag = 'output window, operand 0']
    #allocation7 [shape = 's32[2]{0}', space=sflag, size = 0x8, scoped, tag = 'scoped memory for tpu_custom_call.1']
    #allocation8 [shape = 'u8[512]{0}', space=vmem, size = 0x400, scoped, tag = 'output window, operand 1, single buffered']
    #allocation9 [shape = 's32[1]{0}', space=sflag, size = 0x4, scoped, tag = 'scoped memory for tpu_custom_call.1']
    %17 = vsyncpa [#allocation7], 0
    %s18 = scalar_lea.sflag [#allocation7], 1
    %19 = vsyncpa %s18, 0
    %20 = vsyncpa [#allocation9], 0
    loop: start=0, step=1, limit=5
    $region2: #{tpu_custom_call.1} parent=1 // loop_pre_header
      _
    $region3: #{tpu_custom_call.1} parent=1 // loop_header
      %s22 = sphi 0, %s26
      %p23 = scmp.ge.s32.totalorder %s22, 5
      %s32 = sphi 0, %s34
      %s35 = sphi 0, %s32
      %s36 = sphi 0, %s35
      %s52 = sphi 0, %s36
      %s56 = sphi 0, %s56
      %s58 = sphi 0, %s56
      %s59 = sphi 0, %s58
      %s73 = sphi 0, %s59
      %s77 = sphi 0, %s77
      %s79 = sphi 0, %s77
      %s80 = sphi 0, %s79
      %s94 = sphi 0, %s80
      %s98 = sphi 0, %s98
      %s100 = sphi 0, %s98
      %s101 = sphi 0, %s100
      %s115 = sphi 0, %s101
      %s119 = sphi 0, %s119
      %s121 = sphi 0, %s119
      %s122 = sphi 0, %s121
      %s136 = sphi 0, %s122
      %s140 = sphi 0, %s140
      %s142 = sphi 0, %s140
      %s143 = sphi 0, %s142
      %s157 = sphi 0, %s143
      %s163 = sphi 0, %s165
      %s166 = sphi 0, %s163
      %s167 = sphi 0, %s166
      %s183 = sphi 0, %s167
      %s187 = sphi 0, %s187
      %s189 = sphi 0, %s187
      %s190 = sphi 0, %s189
      %s204 = sphi 0, %s190
    $region4: #{tpu_custom_call.1} parent=1 // loop_header_branch
      %25 = sbr.rel (%p23) target = $region8
    $region5: #{tpu_custom_call.1} parent=1 // loop_body
      %s27 = ssub.s32 %s22, 1
      %s28 = ssub.s32 %s22, 2
      %s29 = sadd.s32 %s22, 1
      %s30 = ssub.s32 %s22, %s29
      %p31 = scmp.eq.s32.totalorder %s30, 0
      %s33 = sadd.s32 %s32, 1
      %s34 = scalar_select %p31, %s32, %s33
      %p37 = pneg %p31
      %p38 = scmp.eq.s32.totalorder %s22, 2
      %p39 = por %p37, %p38
      %p40 = scmp.ne.s32.totalorder %s32, %s35
      %p41 = scmp.eq.s32.totalorder %s22, 0
      %p42 = por %p40, %p41
      %p43 = scmp.ne.s32.totalorder %s32, %s35
      %p44 = scmp.eq.s32.totalorder %s27, 2
      %p45 = por %p43, %p44
      %p46 = scmp.ne.s32.totalorder %s35, %s36
      %p47 = scmp.eq.s32.totalorder %s27, 0
      %p48 = por %p46, %p47
      %p49 = scmp.ne.s32.totalorder %s35, %s36
      %p50 = scmp.eq.s32.totalorder %s28, 2
      %p51 = por %p49, %p50
      %p53 = scmp.ne.s32.totalorder %s36, %s52
      %p54 = scmp.eq.s32.totalorder %s28, 0
      %p55 = por %p53, %p54
      %s57 = sadd.s32 %s56, 1
      %p60 = scmp.eq.s32.totalorder %s22, 2
      %p61 = scmp.ne.s32.totalorder %s56, %s58
      %p62 = scmp.eq.s32.totalorder %s22, 0
      %p63 = por %p61, %p62
      %p64 = scmp.ne.s32.totalorder %s56, %s58
      %p65 = scmp.eq.s32.totalorder %s27, 2
      %p66 = por %p64, %p65
      %p67 = scmp.ne.s32.totalorder %s58, %s59
      %p68 = scmp.eq.s32.totalorder %s27, 0
      %p69 = por %p67, %p68
      %p70 = scmp.ne.s32.totalorder %s58, %s59
      %p71 = scmp.eq.s32.totalorder %s28, 2
      %p72 = por %p70, %p71
      %p74 = scmp.ne.s32.totalorder %s59, %s73
      %p75 = scmp.eq.s32.totalorder %s28, 0
      %p76 = por %p74, %p75
      %s78 = sadd.s32 %s77, 1
      %p81 = scmp.eq.s32.totalorder %s22, 2
      %p82 = scmp.ne.s32.totalorder %s77, %s79
      %p83 = scmp.eq.s32.totalorder %s22, 0
      %p84 = por %p82, %p83
      %p85 = scmp.ne.s32.totalorder %s77, %s79
      %p86 = scmp.eq.s32.totalorder %s27, 2
      %p87 = por %p85, %p86
      %p88 = scmp.ne.s32.totalorder %s79, %s80
      %p89 = scmp.eq.s32.totalorder %s27, 0
      %p90 = por %p88, %p89
      %p91 = scmp.ne.s32.totalorder %s79, %s80
      %p92 = scmp.eq.s32.totalorder %s28, 2
      %p93 = por %p91, %p92
      %p95 = scmp.ne.s32.totalorder %s80, %s94
      %p96 = scmp.eq.s32.totalorder %s28, 0
      %p97 = por %p95, %p96
      %s99 = sadd.s32 %s98, 1
      %p102 = scmp.eq.s32.totalorder %s22, 2
      %p103 = scmp.ne.s32.totalorder %s98, %s100
      %p104 = scmp.eq.s32.totalorder %s22, 0
      %p105 = por %p103, %p104
      %p106 = scmp.ne.s32.totalorder %s98, %s100
      %p107 = scmp.eq.s32.totalorder %s27, 2
      %p108 = por %p106, %p107
      %p109 = scmp.ne.s32.totalorder %s100, %s101
      %p110 = scmp.eq.s32.totalorder %s27, 0
      %p111 = por %p109, %p110
      %p112 = scmp.ne.s32.totalorder %s100, %s101
      %p113 = scmp.eq.s32.totalorder %s28, 2
      %p114 = por %p112, %p113
      %p116 = scmp.ne.s32.totalorder %s101, %s115
      %p117 = scmp.eq.s32.totalorder %s28, 0
      %p118 = por %p116, %p117
      %s120 = sadd.s32 %s119, 1
      %p123 = scmp.eq.s32.totalorder %s22, 2
      %p124 = scmp.ne.s32.totalorder %s119, %s121
      %p125 = scmp.eq.s32.totalorder %s22, 0
      %p126 = por %p124, %p125
      %p127 = scmp.ne.s32.totalorder %s119, %s121
      %p128 = scmp.eq.s32.totalorder %s27, 2
      %p129 = por %p127, %p128
      %p130 = scmp.ne.s32.totalorder %s121, %s122
      %p131 = scmp.eq.s32.totalorder %s27, 0
      %p132 = por %p130, %p131
      %p133 = scmp.ne.s32.totalorder %s121, %s122
      %p134 = scmp.eq.s32.totalorder %s28, 2
      %p135 = por %p133, %p134
      %p137 = scmp.ne.s32.totalorder %s122, %s136
      %p138 = scmp.eq.s32.totalorder %s28, 0
      %p139 = por %p137, %p138
      %s141 = sadd.s32 %s140, 1
      %p144 = scmp.eq.s32.totalorder %s22, 2
      %p145 = scmp.ne.s32.totalorder %s140, %s142
      %p146 = scmp.eq.s32.totalorder %s22, 0
      %p147 = por %p145, %p146
      %p148 = scmp.ne.s32.totalorder %s140, %s142
      %p149 = scmp.eq.s32.totalorder %s27, 2
      %p150 = por %p148, %p149
      %p151 = scmp.ne.s32.totalorder %s142, %s143
      %p152 = scmp.eq.s32.totalorder %s27, 0
      %p153 = por %p151, %p152
      %p154 = scmp.ne.s32.totalorder %s142, %s143
      %p155 = scmp.eq.s32.totalorder %s28, 2
      %p156 = por %p154, %p155
      %p158 = scmp.ne.s32.totalorder %s143, %s157
      %p159 = scmp.eq.s32.totalorder %s28, 0
      %p160 = por %p158, %p159
      %s161 = ssub.s32 %s22, %s29
      %p162 = scmp.eq.s32.totalorder %s161, 0
      %s164 = sadd.s32 %s163, 1
      %s165 = scalar_select %p162, %s163, %s164
      %p168 = pneg %p162
      %p169 = scmp.eq.s32.totalorder %s22, 2
      %p170 = por %p168, %p169
      %p171 = scmp.ne.s32.totalorder %s163, %s166
      %p172 = scmp.eq.s32.totalorder %s22, 0
      %p173 = por %p171, %p172
      %p174 = scmp.ne.s32.totalorder %s163, %s166
      %p175 = scmp.eq.s32.totalorder %s27, 2
      %p176 = por %p174, %p175
      %p177 = scmp.ne.s32.totalorder %s166, %s167
      %p178 = scmp.eq.s32.totalorder %s27, 0
      %p179 = por %p177, %p178
      %p180 = scmp.ne.s32.totalorder %s166, %s167
      %p181 = scmp.eq.s32.totalorder %s28, 2
      %p182 = por %p180, %p181
      %p184 = scmp.ne.s32.totalorder %s167, %s183
      %p185 = scmp.eq.s32.totalorder %s28, 0
      %p186 = por %p184, %p185
      %s188 = sadd.s32 %s187, 1
      %p191 = scmp.eq.s32.totalorder %s22, 2
      %p192 = scmp.ne.s32.totalorder %s187, %s189
      %p193 = scmp.eq.s32.totalorder %s22, 0
      %p194 = por %p192, %p193
      %p195 = scmp.ne.s32.totalorder %s187, %s189
      %p196 = scmp.eq.s32.totalorder %s27, 2
      %p197 = por %p195, %p196
      %p198 = scmp.ne.s32.totalorder %s189, %s190
      %p199 = scmp.eq.s32.totalorder %s27, 0
      %p200 = por %p198, %p199
      %p201 = scmp.ne.s32.totalorder %s189, %s190
      %p202 = scmp.eq.s32.totalorder %s28, 2
      %p203 = por %p201, %p202
      %p205 = scmp.ne.s32.totalorder %s190, %s204
      %p206 = scmp.eq.s32.totalorder %s28, 0
      %p207 = por %p205, %p206
      %p208 = scmp.le.s32.totalorder 1, %s22
      %p209 = scmp.lt.s32.totalorder %s22, 4
      %p210 = pnand %p208, %p209
      %p211 = pneg %p210
      // Predicated region
      $region9: #{tpu_custom_call.1} parent=5 // pred_check
        _
      $region10: #{tpu_custom_call.1} parent=5 // pred_check_branch
        %213 = sbr.rel (%p210) target = $region12
      $region11: #{tpu_custom_call.1} parent=5 // pred_region
        %s214 = ssub.s32 %s22, 1
        // Predicated region
        $region13: #{tpu_custom_call.1} parent=11 // pred_check
          %p215 = pneg %p69
        $region14: #{tpu_custom_call.1} parent=11 // pred_check_branch
          %217 = sbr.rel (%p215) target = $region16
        $region15: #{tpu_custom_call.1} parent=11 // pred_region
          _
        $region16: #{tpu_custom_call.1} parent=11 // pred_fallthru
          _
        // Predicated region
        $region17: #{tpu_custom_call.1} parent=11 // pred_check
          %p218 = pneg %p90
        $region18: #{tpu_custom_call.1} parent=11 // pred_check_branch
          %220 = sbr.rel (%p218) target = $region20
        $region19: #{tpu_custom_call.1} parent=11 // pred_region
          _
        $region20: #{tpu_custom_call.1} parent=11 // pred_fallthru
          _
        // Predicated region
        $region21: #{tpu_custom_call.1} parent=11 // pred_check
          %p221 = pneg %p111
        $region22: #{tpu_custom_call.1} parent=11 // pred_check_branch
          %223 = sbr.rel (%p221) target = $region24
        $region23: #{tpu_custom_call.1} parent=11 // pred_region
          _
        $region24: #{tpu_custom_call.1} parent=11 // pred_fallthru
          _
        // Predicated region
        $region25: #{tpu_custom_call.1} parent=11 // pred_check
          %p224 = pneg %p132
        $region26: #{tpu_custom_call.1} parent=11 // pred_check_branch
          %226 = sbr.rel (%p224) target = $region28
        $region27: #{tpu_custom_call.1} parent=11 // pred_region
          _
        $region28: #{tpu_custom_call.1} parent=11 // pred_fallthru
          _
        // Predicated region
        $region29: #{tpu_custom_call.1} parent=11 // pred_check
          %p227 = pneg %p153
        $region30: #{tpu_custom_call.1} parent=11 // pred_check_branch
          %229 = sbr.rel (%p227) target = $region32
        $region31: #{tpu_custom_call.1} parent=11 // pred_region
          _
        $region32: #{tpu_custom_call.1} parent=11 // pred_fallthru
          _
      $region12: #{tpu_custom_call.1} parent=5 // pred_fallthru
        _
      %p230 = scmp.lt.s32.totalorder %s22, 3
      // Predicated region
      $region33: #{tpu_custom_call.1} parent=5 // pred_check
        %p231 = pneg %p230
      $region34: #{tpu_custom_call.1} parent=5 // pred_check_branch
        %233 = sbr.rel (%p231) target = $region36
      $region35: #{tpu_custom_call.1} parent=5 // pred_region
        // Predicated region
        $region37: #{tpu_custom_call.1} parent=35 // pred_check
          %p234 = pneg %p42
        $region38: #{tpu_custom_call.1} parent=35 // pred_check_branch
          %236 = sbr.rel (%p234) target = $region40
        $region39: #{tpu_custom_call.1} parent=35 // pred_region
          %p237 = scmp.lt.s32.totalorder %s22, 2
          %s238 = scalar_select %p237, %s22, 2
          %s239 = smul.addr %s238, 8
          %s240 = scalar_lea.vmem %s1, %s239
        $region40: #{tpu_custom_call.1} parent=35 // pred_fallthru
          _
      $region36: #{tpu_custom_call.1} parent=5 // pred_fallthru
        _
      %p241 = scmp.le.s32.totalorder 1, %s22
      %p242 = scmp.lt.s32.totalorder %s22, 4
      %p243 = pnand %p241, %p242
      %p244 = pneg %p243
      // Predicated region
      $region41: #{tpu_custom_call.1} parent=5 // pred_check
        _
      $region42: #{tpu_custom_call.1} parent=5 // pred_check_branch
        %246 = sbr.rel (%p243) target = $region44
      $region43: #{tpu_custom_call.1} parent=5 // pred_region
        %s247 = ssub.s32 %s22, 1
        %p248 = scmp.lt.s32.totalorder %s27, 2
        %s249 = scalar_select %p248, %s27, 2
        %s250 = smul.addr %s249, 8
        %s251 = scalar_lea.vmem %s1, %s250
        %p252 = pneg %p48
        %p253 = pneg %p45
        %p254 = pneg %p69
        %p255 = pneg %p66
        %p256 = pneg %p90
        %p257 = pneg %p87
        %p258 = pneg %p111
        %p259 = pneg %p108
        %p260 = pneg %p132
        %p261 = pneg %p129
        %p262 = pneg %p153
        %p263 = pneg %p150
        %p264 = pneg %p179
        %p265 = pneg %p176
        %s266 = sand.u32 %s166, 1
        %s267 = scalar_lea.sflag [#allocation7], %s266
        %s268 = sand.u32 %s166, 1
        %s269 = scalar_lea.vmem [#allocation6], %s268
        %p270 = pneg %p200
        %p271 = pneg %p197
        %p272 = scmp.lt.s32.totalorder %s27, 2
        %s273 = scalar_select %p272, %s27, 2
        %s274 = smul.addr %s273, 8
        %s275 = scalar_lea.vmem %s1, %s274
        %p276 = scmp.eq.s32.totalorder %s27, 0
        // Predicated region
        $region45: #{tpu_custom_call.1} parent=43 // pred_check
          %p277 = pneg %p276
        $region46: #{tpu_custom_call.1} parent=43 // pred_check_branch
          %279 = sbr.rel (%p277) target = $region48
        $region47: #{tpu_custom_call.1} parent=43 // pred_region
          %s280 = scalar_lea.smem [#allocation2], 0
          %281 = sst [smem:[%s280]] 0.0
          %s282 = scalar_lea.smem [#allocation2], 1
          %283 = sst [smem:[%s282]] 0.0
          %s284 = scalar_lea.smem [#allocation2], 2
          %285 = sst [smem:[%s284]] 0.0
        $region48: #{tpu_custom_call.1} parent=43 // pred_fallthru
          _
        %v286 = vld [vmem:[%s275] sm:$0x3f]
        %v287 = vld [vmem:[%s3] sm:$0xff]
        %v288 = vld [vmem:[%s3 + $0x8] sm:$0xff]
        %v289 = vld [vmem:[%s3 + $0x10] sm:$0xff]
        %v290 = vld [vmem:[%s3 + $0x18] sm:$0xff]
        %v291 = vld [vmem:[%s4] sm:$0xff]
        %v292 = vld [vmem:[%s4 + $0x8] sm:$0xff]
        %v293 = vld [vmem:[%s4 + $0x10] sm:$0xff]
        %v294 = vld [vmem:[%s4 + $0x18] sm:$0xff]
        %296 = vset.pattern.permute.xlu0 0
        %297 = vperm.xlu0 %296, %v287
        %v298 = vpop.permute.xlu0 %297
        %301 = vset.pattern.permute.xlu0 0
        %302 = vperm.xlu0 %301, %v288
        %v303 = vpop.permute.xlu0 %302
        %306 = vset.pattern.permute.xlu0 0
        %307 = vperm.xlu0 %306, %v289
        %v308 = vpop.permute.xlu0 %307
        %311 = vset.pattern.permute.xlu0 0
        %312 = vperm.xlu0 %311, %v290
        %v313 = vpop.permute.xlu0 %312
        %v315 = vlaneseq
        %v316 = vshrl.u32 %v315, 7
        %v317 = vsub.s32 0, %v316
        %v318 = vrot.slane %v286, %v317
        %v319 = vmul.f32 %v298, %v318
        %v320 = vmul.f32 %v303, %v318
        %v321 = vmul.f32 %v308, %v318
        %v322 = vmul.f32 %v313, %v318
        %324 = vset.pattern.permute.xlu0 0
        %325 = vperm.xlu0 %324, %v291
        %v326 = vpop.permute.xlu0 %325
        %329 = vset.pattern.permute.xlu0 0
        %330 = vperm.xlu0 %329, %v292
        %v331 = vpop.permute.xlu0 %330
        %334 = vset.pattern.permute.xlu0 0
        %335 = vperm.xlu0 %334, %v293
        %v336 = vpop.permute.xlu0 %335
        %339 = vset.pattern.permute.xlu0 0
        %340 = vperm.xlu0 %339, %v294
        %v341 = vpop.permute.xlu0 %340
        %v343 = vadd.f32 %v319, %v326
        %v344 = vadd.f32 %v320, %v331
        %v345 = vadd.f32 %v321, %v336
        %v346 = vadd.f32 %v322, %v341
        %347 = vset.pattern.permute.xlu0 1
        %348 = vperm.xlu0 %347, %v287
        %v349 = vpop.permute.xlu0 %348
        %351 = vset.pattern.permute.xlu0 1
        %352 = vperm.xlu0 %351, %v288
        %v353 = vpop.permute.xlu0 %352
        %355 = vset.pattern.permute.xlu0 1
        %356 = vperm.xlu0 %355, %v289
        %v357 = vpop.permute.xlu0 %356
        %359 = vset.pattern.permute.xlu0 1
        %360 = vperm.xlu0 %359, %v290
        %v361 = vpop.permute.xlu0 %360
        %v363 = vlaneseq
        %v364 = vshrl.u32 %v363, 7
        %v365 = vsub.s32 1, %v364
        %v366 = vrot.slane %v286, %v365
        %v367 = vmul.f32 %v349, %v366
        %v368 = vmul.f32 %v353, %v366
        %v369 = vmul.f32 %v357, %v366
        %v370 = vmul.f32 %v361, %v366
        %v371 = vadd.f32 %v343, %v367
        %v372 = vadd.f32 %v344, %v368
        %v373 = vadd.f32 %v345, %v369
        %v374 = vadd.f32 %v346, %v370
        %375 = vset.pattern.permute.xlu0 2
        %376 = vperm.xlu0 %375, %v287
        %v377 = vpop.permute.xlu0 %376
        %379 = vset.pattern.permute.xlu0 2
        %380 = vperm.xlu0 %379, %v288
        %v381 = vpop.permute.xlu0 %380
        %383 = vset.pattern.permute.xlu0 2
        %384 = vperm.xlu0 %383, %v289
        %v385 = vpop.permute.xlu0 %384
        %387 = vset.pattern.permute.xlu0 2
        %388 = vperm.xlu0 %387, %v290
        %v389 = vpop.permute.xlu0 %388
        %v391 = vlaneseq
        %v392 = vshrl.u32 %v391, 7
        %v393 = vsub.s32 2, %v392
        %v394 = vrot.slane %v286, %v393
        %v395 = vmul.f32 %v377, %v394
        %v396 = vmul.f32 %v381, %v394
        %v397 = vmul.f32 %v385, %v394
        %v398 = vmul.f32 %v389, %v394
        %v399 = vadd.f32 %v371, %v395
        %v400 = vadd.f32 %v372, %v396
        %v401 = vadd.f32 %v373, %v397
        %v402 = vadd.f32 %v374, %v398
        %403 = vset.pattern.permute.xlu0 3
        %404 = vperm.xlu0 %403, %v287
        %v405 = vpop.permute.xlu0 %404
        %407 = vset.pattern.permute.xlu0 3
        %408 = vperm.xlu0 %407, %v288
        %v409 = vpop.permute.xlu0 %408
        %411 = vset.pattern.permute.xlu0 3
        %412 = vperm.xlu0 %411, %v289
        %v413 = vpop.permute.xlu0 %412
        %415 = vset.pattern.permute.xlu0 3
        %416 = vperm.xlu0 %415, %v290
        %v417 = vpop.permute.xlu0 %416
        %v419 = vlaneseq
        %v420 = vshrl.u32 %v419, 7
        %v421 = vsub.s32 3, %v420
        %v422 = vrot.slane %v286, %v421
        %v423 = vmul.f32 %v405, %v422
        %v424 = vmul.f32 %v409, %v422
        %v425 = vmul.f32 %v413, %v422
        %v426 = vmul.f32 %v417, %v422
        %v427 = vadd.f32 %v399, %v423
        %v428 = vadd.f32 %v400, %v424
        %v429 = vadd.f32 %v401, %v425
        %v430 = vadd.f32 %v402, %v426
        %431 = vset.pattern.permute.xlu0 4
        %432 = vperm.xlu0 %431, %v287
        %v433 = vpop.permute.xlu0 %432
        %435 = vset.pattern.permute.xlu0 4
        %436 = vperm.xlu0 %435, %v288
        %v437 = vpop.permute.xlu0 %436
        %439 = vset.pattern.permute.xlu0 4
        %440 = vperm.xlu0 %439, %v289
        %v441 = vpop.permute.xlu0 %440
        %443 = vset.pattern.permute.xlu0 4
        %444 = vperm.xlu0 %443, %v290
        %v445 = vpop.permute.xlu0 %444
        %v447 = vlaneseq
        %v448 = vshrl.u32 %v447, 7
        %v449 = vsub.s32 4, %v448
        %v450 = vrot.slane %v286, %v449
        %v451 = vmul.f32 %v433, %v450
        %v452 = vmul.f32 %v437, %v450
        %v453 = vmul.f32 %v441, %v450
        %v454 = vmul.f32 %v445, %v450
        %v455 = vadd.f32 %v427, %v451
        %v456 = vadd.f32 %v428, %v452
        %v457 = vadd.f32 %v429, %v453
        %v458 = vadd.f32 %v430, %v454
        %459 = vset.pattern.permute.xlu0 5
        %460 = vperm.xlu0 %459, %v287
        %v461 = vpop.permute.xlu0 %460
        %463 = vset.pattern.permute.xlu0 5
        %464 = vperm.xlu0 %463, %v288
        %v465 = vpop.permute.xlu0 %464
        %467 = vset.pattern.permute.xlu0 5
        %468 = vperm.xlu0 %467, %v289
        %v469 = vpop.permute.xlu0 %468
        %471 = vset.pattern.permute.xlu0 5
        %472 = vperm.xlu0 %471, %v290
        %v473 = vpop.permute.xlu0 %472
        %v475 = vlaneseq
        %v476 = vshrl.u32 %v475, 7
        %v477 = vsub.s32 5, %v476
        %v478 = vrot.slane %v286, %v477
        %v479 = vmul.f32 %v461, %v478
        %v480 = vmul.f32 %v465, %v478
        %v481 = vmul.f32 %v469, %v478
        %v482 = vmul.f32 %v473, %v478
        %v483 = vadd.f32 %v455, %v479
        %v484 = vadd.f32 %v456, %v480
        %v485 = vadd.f32 %v457, %v481
        %v486 = vadd.f32 %v458, %v482
        %v487 = vtanh.pop %v483
        %v488 = vtanh.pop %v484
        %v489 = vtanh.pop %v485
        %v490 = vtanh.pop %v486
        %v491 = vld [vmem:[%s5] sm:$0xff]
        %v492 = vld [vmem:[%s5 + $0x8] sm:$0xff]
        %v493 = vld [vmem:[%s5 + $0x10] sm:$0xff]
        %v494 = vld [vmem:[%s5 + $0x18] sm:$0xff]
        %496 = vset.pattern.permute.xlu0 0
        %497 = vperm.xlu0 %496, %v491
        %v498 = vpop.permute.xlu0 %497
        %501 = vset.pattern.permute.xlu0 0
        %502 = vperm.xlu0 %501, %v492
        %v503 = vpop.permute.xlu0 %502
        %506 = vset.pattern.permute.xlu0 0
        %507 = vperm.xlu0 %506, %v493
        %v508 = vpop.permute.xlu0 %507
        %511 = vset.pattern.permute.xlu0 0
        %512 = vperm.xlu0 %511, %v494
        %v513 = vpop.permute.xlu0 %512
        %v515 = vmul.f32 %v498, %v487
        %v516 = vmul.f32 %v503, %v488
        %v517 = vmul.f32 %v508, %v489
        %v518 = vmul.f32 %v513, %v490
        %v519 = vadd.f32 %v515, %v516
        %v520 = vadd.f32 %v519, %v517
        %v521 = vadd.f32 %v520, %v518
        %v522 = vrot.slane %v521, 4
        %v523 = vadd.f32 %v521, %v522
        %v524 = vrot.slane %v523, 2
        %v525 = vadd.f32 %v523, %v524
        %v526 = vrot.slane %v525, 1
        %v527 = vadd.f32 %v525, %v526
        %v528 = vld [vmem:[#allocation5] sm:$0x1]
        %530 = vset.pattern.permute.xlu0 0
        %531 = vperm.xlu0 %530, %v528
        %v532 = vpop.permute.xlu0 %531
        %v534 = vlaneseq
        %v535 = vshrl.u32 %v534, 7
        %v536 = vsub.s32 0, %v535
        %v537 = vrot.slane %v532, %v536
        %v538 = vadd.f32 %v527, %v537
        %539 = vst [vmem:[%s269] sm:$0x1] %v538
        %s540 = sld [smem:[#allocation4]]
        %s541 = smul.u32 %s27, 128
        %s542 = sshra.s32 %s541, 7
        %s543 = sand.u32 %s541, 127
        %s544 = scalar_lea.vmem %s2, %s542
        %v545 = vld [vmem:[%s544] sm:$0x1]
        %v546 = vlaneseq
        %v547 = vand.u32 %v546, 127
        %v548 = vstv %s541
        %v549 = vadd.s32 %v547, %v548
        %v550 = vstv %s540
        %vm551 = vcmp.lt.s32.totalorder %v549, %v550
        %v552 = vsub.f32 %v538, %v545
        %v553 = vsel %vm551, %v552, 0.0
        %s554 = sld [smem:[#allocation2]]
        %v555 = vmul.f32 %v553, %v553
        %vm556 = vcmask 1040384
        %v557 = vsel %vm556, %v555, 0.0
        %558 = vadd.xlane.f32.xlu0 %v557
        %v559 = vpop.xlane.xlu0 %558
        %v560 = vrot.slane %v559, 4
        %v561 = vadd.f32 %v559, %v560
        %v562 = vrot.slane %v561, 2
        %v563 = vadd.f32 %v561, %v562
        %v564 = vrot.slane %v563, 1
        %v565 = vadd.f32 %v563, %v564
        %s566 = vtos %v565
        %s567 = sadd.f32 %s554, %s566
        %s568 = scalar_lea.smem [#allocation2], 0
        %569 = sst [smem:[%s568]] %s567
        %s570 = sld [smem:[#allocation2 + $0x1]]
        %v571 = vand.u32 2147483647, %v553
        %v572 = vsel %vm556, %v571, 0.0
        %573 = vadd.xlane.f32.xlu0 %v572
        %v574 = vpop.xlane.xlu0 %573
        %v575 = vrot.slane %v574, 4
        %v576 = vadd.f32 %v574, %v575
        %v577 = vrot.slane %v576, 2
        %v578 = vadd.f32 %v576, %v577
        %v579 = vrot.slane %v578, 1
        %v580 = vadd.f32 %v578, %v579
        %s581 = vtos %v580
        %s582 = sadd.f32 %s570, %s581
        %s583 = scalar_lea.smem [#allocation2], 1
        %584 = sst [smem:[%s583]] %s582
        %s585 = sld [smem:[#allocation2 + $0x2]]
        %v586 = vsel %vm551, %v538, 0.0
        %v587 = vsel %vm556, %v586, 0.0
        %588 = vadd.xlane.f32.xlu0 %v587
        %v589 = vpop.xlane.xlu0 %588
        %v590 = vrot.slane %v589, 4
        %v591 = vadd.f32 %v589, %v590
        %v592 = vrot.slane %v591, 2
        %v593 = vadd.f32 %v591, %v592
        %v594 = vrot.slane %v593, 1
        %v595 = vadd.f32 %v593, %v594
        %s596 = vtos %v595
        %s597 = sadd.f32 %s585, %s596
        %s598 = scalar_lea.smem [#allocation2], 2
        %599 = sst [smem:[%s598]] %s597
        %p600 = scmp.eq.s32.totalorder %s27, 2
        // Predicated region
        $region49: #{tpu_custom_call.1} parent=43 // pred_check
          %p601 = pneg %p600
        $region50: #{tpu_custom_call.1} parent=43 // pred_check_branch
          %603 = sbr.rel (%p601) target = $region52
        $region51: #{tpu_custom_call.1} parent=43 // pred_region
          %s604 = scvt.s32.f32 %s540
          %s605 = sld [smem:[#allocation2]]
          %s606 = sld [smem:[#allocation2 + $0x1]]
          %s607 = sld [smem:[#allocation2 + $0x2]]
          %v608 = vstv %s604
          %v609 = vrcp.pop %v608
          %s610 = vtos %v609
          %s611 = smul.f32 %s605, %s610
          %v612 = vstv %s604
          %v613 = vrcp.pop %v612
          %s614 = vtos %v613
          %s615 = smul.f32 %s606, %s614
          %v616 = vstv %s611
          %v617 = vrsqrt.pop %v616
          %v618 = vmul.f32 %v616, %v617
          %vm619 = vcmp.eq.f32.partialorder %v616, inf
          %v620 = vsel %vm619, %v616, %v618
          %vm621 = vcmp.eq.f32.partialorder %v616, 0.0
          %v622 = vand.u32 %v616, 2147483648
          %v623 = vsel %vm621, %v622, %v620
          %s624 = vtos %v623
          %v625 = vstv %s604
          %v626 = vrcp.pop %v625
          %s627 = vtos %v626
          %s628 = smul.f32 %s607, %s627
          %v629 = vld [vmem:[%s2] sm:$0x7]
          %v630 = vadd.s32 %v547, 128
          %v631 = vadd.s32 %v547, 256
          %vm632 = vcmp.lt.s32.totalorder %v547, %v550
          %vm633 = vcmp.lt.s32.totalorder %v630, %v550
          %vm634 = vcmp.lt.s32.totalorder %v631, %v550
          %v635 = vstv %s628
          %v636 = vsub.f32 %v629, %v635
          %v638 = vlaneseq
          %v639 = vshrl.u32 %v638, 7
          %v640 = vsub.s32 0, %v639
          %v641 = vrot.slane %v636, %v640
          %v642 = vlaneseq
          %v643 = vshrl.u32 %v642, 7
          %v644 = vsub.s32 1, %v643
          %v645 = vrot.slane %v636, %v644
          %v646 = vlaneseq
          %v647 = vshrl.u32 %v646, 7
          %v648 = vsub.s32 2, %v647
          %v649 = vrot.slane %v636, %v648
          %v653 = vsel %vm632, %v641, 0.0
          %v654 = vsel %vm633, %v645, 0.0
          %v655 = vsel %vm634, %v649, 0.0
          %v656 = vand.u32 2147483647, %v653
          %v657 = vand.u32 2147483647, %v654
          %v658 = vand.u32 2147483647, %v655
          %v659 = vsel %vm556, %v656, 0.0
          %v660 = vsel %vm556, %v657, 0.0
          %v661 = vadd.f32 %v659, %v660
          %v662 = vsel %vm556, %v658, 0.0
          %v663 = vadd.f32 %v661, %v662
          %664 = vadd.xlane.f32.xlu0 %v663
          %v665 = vpop.xlane.xlu0 %664
          %v666 = vrot.slane %v665, 4
          %v667 = vadd.f32 %v665, %v666
          %v668 = vrot.slane %v667, 2
          %v669 = vadd.f32 %v667, %v668
          %v670 = vrot.slane %v669, 1
          %v671 = vadd.f32 %v669, %v670
          %s672 = vtos %v671
          %v673 = vstv %s672
          %v674 = vrcp.pop %v673
          %s675 = vtos %v674
          %s676 = smul.f32 %s606, %s675
          %v677 = vmul.f32 %v653, %v653
          %v678 = vmul.f32 %v654, %v654
          %v679 = vmul.f32 %v655, %v655
          %v680 = vsel %vm556, %v677, 0.0
          %v681 = vsel %vm556, %v678, 0.0
          %v682 = vadd.f32 %v680, %v681
          %v683 = vsel %vm556, %v679, 0.0
          %v684 = vadd.f32 %v682, %v683
          %685 = vadd.xlane.f32.xlu0 %v684
          %v686 = vpop.xlane.xlu0 %685
          %v687 = vrot.slane %v686, 4
          %v688 = vadd.f32 %v686, %v687
          %v689 = vrot.slane %v688, 2
          %v690 = vadd.f32 %v688, %v689
          %v691 = vrot.slane %v690, 1
          %v692 = vadd.f32 %v690, %v691
          %s693 = vtos %v692
          %v694 = vstv %s693
          %v695 = vrcp.pop %v694
          %s696 = vtos %v695
          %s697 = smul.f32 %s605, %s696
          %s698 = ssub.f32 1.0, %s697
          %vm699 = vcmp.eq.s32.totalorder %v547, 0
          %v700 = vstv %s611
          %v701 = vsel %vm699, %v700, 0.0
          %vm702 = vcmp.eq.s32.totalorder %v547, 1
          %v703 = vstv %s615
          %v704 = vsel %vm702, %v703, %v701
          %vm705 = vcmp.eq.s32.totalorder %v547, 2
          %v706 = vstv %s624
          %v707 = vsel %vm705, %v706, %v704
          %vm708 = vcmp.eq.s32.totalorder %v547, 3
          %v709 = vstv %s676
          %v710 = vsel %vm708, %v709, %v707
          %vm711 = vcmp.eq.s32.totalorder %v547, 4
          %v712 = vstv %s698
          %v713 = vsel %vm711, %v712, %v710
          %714 = vst [vmem:[#allocation8] sm:$0x1] %v713
        $region52: #{tpu_custom_call.1} parent=43 // pred_fallthru
          _
        %s715 = sand.u32 %s166, 1
        %s716 = scalar_lea.sflag [#allocation7], %s715
        %s717 = sand.u32 %s166, 1
        %s718 = scalar_lea.vmem [#allocation6], %s717
        // Predicated region
        $region53: #{tpu_custom_call.1} parent=43 // pred_check
          %p719 = pneg %p176
        $region54: #{tpu_custom_call.1} parent=43 // pred_check_branch
          %721 = sbr.rel (%p719) target = $region56
        $region55: #{tpu_custom_call.1} parent=43 // pred_region
          %s723 = ssub.s32 16, 16
          %724 = vsyncadd %s716, %s723
          %s725 = smul.addr %s27, 16
          %s726 = scalar_lea.hbm %s7, %s725
          %s728 = sshll.u32 %s718, 4
          %s729 = int_to_ptr.vmem [resolvable:$true] %s728
          %731 = dma.vmem_to_hbm [thread:$0]  %s729, 16, %s726, %s716
        $region56: #{tpu_custom_call.1} parent=43 // pred_fallthru
          _
        // Predicated region
        $region57: #{tpu_custom_call.1} parent=43 // pred_check
          %p732 = pneg %p197
        $region58: #{tpu_custom_call.1} parent=43 // pred_check_branch
          %734 = sbr.rel (%p732) target = $region60
        $region59: #{tpu_custom_call.1} parent=43 // pred_region
          %s736 = ssub.s32 16, 16
          %737 = vsyncadd [#allocation9], %s736
          %s739 = sshll.u32 [#allocation8], 4
          %s740 = int_to_ptr.vmem [resolvable:$true] %s739
          %742 = dma.vmem_to_hbm [thread:$0]  %s740, 16, %s8, [#allocation9]
        $region60: #{tpu_custom_call.1} parent=43 // pred_fallthru
          _
        // Predicated region
        $region61: #{tpu_custom_call.1} parent=43 // pred_check
          %p743 = pneg %p197
        $region62: #{tpu_custom_call.1} parent=43 // pred_check_branch
          %745 = sbr.rel (%p743) target = $region64
        $region63: #{tpu_custom_call.1} parent=43 // pred_region
          %746 = dma.done [#allocation9], 16
        $region64: #{tpu_custom_call.1} parent=43 // pred_fallthru
          _
      $region44: #{tpu_custom_call.1} parent=5 // pred_fallthru
        _
      %p747 = scmp.le.s32.totalorder 2, %s22
      // Predicated region
      $region65: #{tpu_custom_call.1} parent=5 // pred_check
        %p748 = pneg %p747
      $region66: #{tpu_custom_call.1} parent=5 // pred_check_branch
        %750 = sbr.rel (%p748) target = $region68
      $region67: #{tpu_custom_call.1} parent=5 // pred_region
        %s751 = ssub.s32 %s22, 2
        // Predicated region
        $region69: #{tpu_custom_call.1} parent=67 // pred_check
          %p752 = pneg %p182
        $region70: #{tpu_custom_call.1} parent=67 // pred_check_branch
          %754 = sbr.rel (%p752) target = $region72
        $region71: #{tpu_custom_call.1} parent=67 // pred_region
          %s755 = sand.u32 %s167, 1
          %s756 = scalar_lea.sflag [#allocation7], %s755
          %s757 = sand.u32 %s167, 1
          %s758 = scalar_lea.vmem [#allocation6], %s757
          %759 = dma.done %s756, 16
        $region72: #{tpu_custom_call.1} parent=67 // pred_fallthru
          _
      $region68: #{tpu_custom_call.1} parent=5 // pred_fallthru
        _
    $region6: #{tpu_custom_call.1} parent=1 // loop_footer
      %s26 = sadd.s32 1, %s22
    $region7: #{tpu_custom_call.1} parent=1 // loop_footer_branch
      %21 = sbr.rel target = $region3
    $region8: #{tpu_custom_call.1} parent=1 // loop_exit
      _
    %760 = vsyncpa [#allocation7], 1
    %s761 = scalar_lea.sflag [#allocation7], 1
    %762 = vsyncpa %s761, 1
    %763 = vsyncpa [#allocation9], 1

</llo_original>
